<compile_context>
chip_gen: v6e
topology: v6e:2x2x1
jax: 0.10.0
libtpu: 0.0.40
codegen_flags: <defaults>
</compile_context>

<pallas_src>
import jax
import jax.numpy as jnp
from jax.experimental import pallas as pl
from jax.experimental.pallas import tpu as pltpu


# ----------------------------------------------------------------------------
# Preferred: Identity is free. No kernel launch at all.
# ----------------------------------------------------------------------------
def identity(x: jax.Array) -> jax.Array:
    """Identity.forward: returns x unchanged. No Pallas call (zero work)."""
    return x


# ----------------------------------------------------------------------------
# Optional: aliased pass-through through a custom-call boundary.
# NOTE: only zero-copy when the input buffer is donated into the enclosing jit
# (jax.jit(..., donate_argnums=...)); otherwise XLA inserts a defensive copy.
# ----------------------------------------------------------------------------
def _noop_kernel(x_ref, o_ref):
    # x_ref and o_ref alias the same HBM buffer; nothing to do.
    pass


def identity_alias(x: jax.Array) -> jax.Array:
    return pl.pallas_call(
        _noop_kernel,
        out_shape=jax.ShapeDtypeStruct(x.shape, x.dtype),
        in_specs=[pl.BlockSpec(memory_space=pl.ANY)],   # raw HBM ref, no auto-DMA
        out_specs=pl.BlockSpec(memory_space=pl.ANY),    # raw HBM ref, no auto-DMA
        input_output_aliases={0: 0},                    # output IS the input buffer
    )(x)


# ----------------------------------------------------------------------------
# Fallback: lane-dense, large-block streaming copy (when a fresh buffer is
# explicitly required).
# ----------------------------------------------------------------------------
def _copy_kernel(x_ref, o_ref):
    o_ref[...] = x_ref[...]


def _sublane_packing(dtype) -> int:
    """Sublane packing factor: 8 for 4-byte, 16 for 2-byte, 32 for 1-byte."""
    return {4: 8, 2: 16, 1: 32}.get(jnp.dtype(dtype).itemsize, 8)


def _block_byte_target() -> int:
    """Per-block byte budget, generation-aware.

    v5e (16 MiB scoped VMEM default): 2 MiB blocks (double-buffered in+out =
    8 MiB). v6e/v7x (32 MiB scoped default): 4 MiB blocks (16 MiB total) to
    amortize per-grid-step overhead against ~1.4-3.2 TB/s HBM.
    """
    try:
        kind = jax.devices()[0].device_kind.lower()
    except Exception:
        return 2 * 1024 * 1024  # conservative default
    for old in ("v2", "v3", "v4", "v5 lite", "v5e", "v5lite"):
        if old in kind:
            return 2 * 1024 * 1024
    return 4 * 1024 * 1024


def identity_copy(x: jax.Array) -> jax.Array:
    total = x.size
    if total == 0:
        return jnp.copy(x)

    itemsize = jnp.dtype(x.dtype).itemsize

    # Widest lane-dense row (multiple of 128) that tiles the element count.
    width = next(
        (w for w in (16384, 8192, 4096, 2048, 1024, 512, 256, 128) if total % w == 0),
        None,
    )
    if width is None:
        # Odd-sized tensor: a whole-tensor single block risks VMEM OOM on large
        # inputs; a plain XLA copy is exact and safe here.
        # TODO(synk): pad-to-128 Pallas path + small tail copy for odd sizes.
        return jnp.copy(x)

    flat = x.reshape(-1, width)
    rows = flat.shape[0]
    packing = _sublane_packing(x.dtype)

    bytes_per_row = width * itemsize
    target_rows = max(1, _block_byte_target() // bytes_per_row)

    if target_rows >= rows:
        block_rows = rows                                   # full extent (always legal)
    else:
        block_rows = max(packing, (target_rows // packing) * packing)  # sublane-aligned

    # v7x has 2 TensorCores per chip: when the tensor is big enough, ensure the
    # "parallel" grid axis has >= 2 steps so both cores get DMA work.
    if rows >= 2 * packing and block_rows >= rows:
        block_rows = max(packing, ((rows // 2) // packing) * packing)

    grid = (pl.cdiv(rows, block_rows),)
    out = pl.pallas_call(
        _copy_kernel,
        out_shape=jax.ShapeDtypeStruct(flat.shape, flat.dtype),
        grid=grid,
        in_specs=[pl.BlockSpec((block_rows, width), lambda i: (i, 0))],
        out_specs=pl.BlockSpec((block_rows, width), lambda i: (i, 0)),
        compiler_params=pltpu.CompilerParams(
            dimension_semantics=("parallel",),  # lets v7x's 2 TCs split the copy
        ),
    )(flat)
    return out.reshape(x.shape)


if __name__ == "__main__":
    key = jax.random.PRNGKey(0)
    x = jax.random.normal(key, (2, 4, 16, 16), dtype=jnp.float32)

    # Preferred path: pure pass-through (no kernel).
    out = identity(x)
    jax.block_until_ready(out)
    assert out.shape == x.shape and out.dtype == x.dtype
    assert jnp.array_equal(out, x)

    # Pallas streaming-copy path (lane-dense, generation-aware blocks).
    out_copy = identity_copy(x)
    jax.block_until_ready(out_copy)
    assert out_copy.shape == x.shape and out_copy.dtype == x.dtype
    assert jnp.array_equal(out_copy, x)

    # Aliased custom-call boundary path (zero data movement when donated).
    out_alias = identity_alias(x)
    jax.block_until_ready(out_alias)
    assert out_alias.shape == x.shape and out_alias.dtype == x.dtype
    assert jnp.array_equal(out_alias, x)

    print("KERNEL_OK")
</pallas_src>

<mosaic_0001>
module attributes {stable_mosaic.version = 11 : i64} {
  func.func @_copy_kernel(%arg0: i32, %arg1: memref<1x2048xf32, #tpu.memory_space<vmem>>, %arg2: memref<1x2048xf32, #tpu.memory_space<vmem>>) attributes {dimension_semantics = [#tpu.dimension_semantics<parallel>], iteration_bounds = array<i64: 1>, scalar_prefetch = 0 : i64, scratch_operands = 0 : i64, tpu.core_type = #tpu.core_type<tc>, window_params = [{transform_indices = @transform_0, window_bounds = array<i64: 1, 2048>}, {transform_indices = @transform_1, window_bounds = array<i64: 1, 2048>}]} {
    %c0 = arith.constant 0 : index
    %c0_0 = arith.constant 0 : index
    %0 = vector.load %arg1[%c0, %c0_0] : memref<1x2048xf32, #tpu.memory_space<vmem>>, vector<1x2048xf32>
    %c0_1 = arith.constant 0 : index
    %c0_2 = arith.constant 0 : index
    %1 = vector.load %arg2[%c0_1, %c0_2] : memref<1x2048xf32, #tpu.memory_space<vmem>>, vector<1x2048xf32>
    tpu.vector_store %arg2[%c0_1, %c0_2], %0 {strides = array<i32>} : memref<1x2048xf32, #tpu.memory_space<vmem>>, vector<1x2048xf32>,
    return
  }
  func.func @transform_0(%arg0: i32) -> (i32, i32) {
    %c0_i32 = arith.constant 0 : i32
    %c0_i32_0 = arith.constant 0 : i32
    return %arg0, %c0_i32 : i32, i32
  }
  func.func @transform_1(%arg0: i32) -> (i32, i32) {
    %c0_i32 = arith.constant 0 : i32
    %c0_i32_0 = arith.constant 0 : i32
    return %arg0, %c0_i32 : i32, i32
  }
}

</mosaic_0001>

<llo_original>
// kernel: tpu_custom_call.1
$region0: #{tpu_custom_call.1}
  #allocation0 [shape = 'u32[]', space=smem, size = 0x4, offset = 0x4, fixed_abs, tag = 'smem constant byte address 0x4 - core index']
  #allocation1 [shape = 'u32[144,128]{1,0:T(1,128)}', space=vmem, size = 0x12000, scoped, tag = 'internal scratch']
  %s0 = inlined_call_operand.hbm [shape: f32[1,2048], index: 0, kind: input, shape index: {}]
  %s1 = inlined_call_operand.hbm [shape: f32[1,2048], index: 1, kind: output, shape index: {}]
  %s2 = sld [smem:[#allocation0]]
  $region18: #{tpu_custom_call.1} parent=0
    _
  %s4 = ssub.s32 1, %s2
  %s5 = scalar_select 0, %s4, %s2
  $region1: #{tpu_custom_call.1} parent=0
    #allocation2 [shape = 'u8[8192]{0}', space=vmem, size = 0x2000, scoped, tag = 'input window, operand 0, single buffered']
    #allocation3 [shape = 's32[1]{0}', space=sflag, size = 0x4, scoped, tag = 'scoped memory for tpu_custom_call.1']
    #allocation4 [shape = 's32[1]{0}', space=sflag, size = 0x4, scoped, tag = 'scoped memory for tpu_custom_call.1']
    #allocation5 [shape = 'u8[8192]{0}', space=vmem, size = 0x2000, scoped, tag = 'output window, operand 0, single buffered']
    %6 = vsyncpa [#allocation3], 0
    %7 = vsyncpa [#allocation4], 0
    // Predicated region
    $region2: #{tpu_custom_call.1} parent=1 // pred_check
      _
    $region3: #{tpu_custom_call.1} parent=1 // pred_check_branch
      %9 = sbr.rel (0) target = $region5
    $region4: #{tpu_custom_call.1} parent=1 // pred_region
      %s11 = ssub.s32 256, 256
      %12 = vsyncadd [#allocation3], %s11
      %s14 = sshll.u32 [#allocation2], 4
      %s15 = int_to_ptr.vmem [resolvable:$true] %s14
      %17 = dma.hbm_to_vmem [thread:$0]  %s0, 256, %s15, [#allocation3]
    $region5: #{tpu_custom_call.1} parent=1 // pred_fallthru
      _
    // Predicated region
    $region6: #{tpu_custom_call.1} parent=1 // pred_check
      _
    $region7: #{tpu_custom_call.1} parent=1 // pred_check_branch
      %19 = sbr.rel (0) target = $region9
    $region8: #{tpu_custom_call.1} parent=1 // pred_region
      %20 = dma.done [#allocation3], 256
    $region9: #{tpu_custom_call.1} parent=1 // pred_fallthru
      _
    %v21 = vld [vmem:[#allocation2] sm:$0xff]
    %v22 = vld [vmem:[#allocation2 + $0x8] sm:$0xff]
    %23 = vst [vmem:[#allocation5] sm:$0xff] %v21
    %24 = vst [vmem:[#allocation5 + $0x8] sm:$0xff] %v22
    // Predicated region
    $region10: #{tpu_custom_call.1} parent=1 // pred_check
      _
    $region11: #{tpu_custom_call.1} parent=1 // pred_check_branch
      %26 = sbr.rel (0) target = $region13
    $region12: #{tpu_custom_call.1} parent=1 // pred_region
      %s28 = ssub.s32 256, 256
      %29 = vsyncadd [#allocation4], %s28
      %s31 = sshll.u32 [#allocation5], 4
      %s32 = int_to_ptr.vmem [resolvable:$true] %s31
      %34 = dma.vmem_to_hbm [thread:$0]  %s32, 256, %s1, [#allocation4]
    $region13: #{tpu_custom_call.1} parent=1 // pred_fallthru
      _
    // Predicated region
    $region14: #{tpu_custom_call.1} parent=1 // pred_check
      _
    $region15: #{tpu_custom_call.1} parent=1 // pred_check_branch
      %36 = sbr.rel (0) target = $region17
    $region16: #{tpu_custom_call.1} parent=1 // pred_region
      %37 = dma.done [#allocation4], 256
    $region17: #{tpu_custom_call.1} parent=1 // pred_fallthru
      _
    %38 = vsyncpa [#allocation3], 1
    %39 = vsyncpa [#allocation4], 1

</llo_original>
